<compile_context>
chip_gen: v6e
topology: v6e:2x2x1
jax: 0.10.0
libtpu: 0.0.40
codegen_flags: <defaults>
</compile_context>

<pallas_src>
import functools

import numpy as np
import jax
import jax.numpy as jnp
from jax.experimental import pallas as pl
from jax.experimental.pallas import tpu as pltpu

_LANES = 128


def _round_up(x, m):
    return ((x + m - 1) // m) * m


def _vmem_limit_bytes():
    """Scoped-VMEM request: generation-aware, conservative on v7x's 64 MiB."""
    try:
        cap = int(pltpu.get_tpu_info().vmem_capacity_bytes)
    except Exception:
        cap = 64 << 20  # assume the smallest generation (v7x per-TC physical)
    return max(16 << 20, min(cap // 2, 48 << 20))


def _pick_row_tile(m_rows, lane_width, itemsize, vmem_limit, min_grid=8):
    """Rows per tile.

    Budget ~vmem_limit/12 bytes per I/O tile: 4 live double-buffered I/O tile
    buffers plus ~3-4 tile-sized f32 intermediates inside the kernel (f32
    upcast, x-mean, reduction results).  Also cap the tile so the grid has at
    least ~min_grid steps: >=512 KiB tiles already sit near the HBM roofline,
    while a 1-2 step grid idles one of v7x's two TensorCores and removes
    pipelining slack.
    """
    target_bytes = max(512 * 1024, vmem_limit // 12)
    tm = target_bytes // max(1, lane_width * itemsize)
    tm = max(8, (tm // 8) * 8)
    tm_cap = max(8, _round_up(pl.cdiv(m_rows, min_grid), 8))
    tm = min(tm, tm_cap)
    tm = min(tm, _round_up(m_rows, 8))
    return tm


# ---------------------------------------------------------------------------
# Kernels
# ---------------------------------------------------------------------------
def _layernorm_packed_kernel(x_ref, seg_ref, w_ref, b_ref, o_ref, *, eps):
    """Lane-packed channels_last: x tile is (TM, 128) holding 128//c rows of
    length-c channels per packed 128-lane row.  Per-segment mean / variance go
    through the otherwise-idle MXU via a block-diagonal (128,128) matrix whose
    entries are 1/c (so the matmul output IS the broadcast mean directly).
    seg is built at trace time and DMA'd once; no per-step iota/div work.

    NOTE: if the vmatmul slot ever binds on v7x, the segment reduction can be
    replaced by log2(c) pltpu.roll+add steps on the idle XLU.
    """
    x = x_ref[...].astype(jnp.float32)                         # (TM, 128)
    seg = seg_ref[...]                                         # (128, 128) f32
    mean = jnp.dot(x, seg, preferred_element_type=jnp.float32)  # per-seg mean, bcast
    xc = x - mean
    var = jnp.dot(xc * xc, seg, preferred_element_type=jnp.float32)
    inv = jax.lax.rsqrt(var + eps)
    w = w_ref[...].astype(jnp.float32)                         # (1, 128)
    b = b_ref[...].astype(jnp.float32)
    o_ref[...] = (xc * inv * w + b).astype(o_ref.dtype)


def _layernorm_rows_kernel(x_ref, w_ref, b_ref, o_ref, *, eps):
    """General channels_last: x tile is (TM, C), reduce along the lane axis."""
    x = x_ref[...].astype(jnp.float32)
    mean = jnp.mean(x, axis=-1, keepdims=True)
    xc = x - mean
    var = jnp.mean(xc * xc, axis=-1, keepdims=True)
    inv = jax.lax.rsqrt(var + eps)
    w = w_ref[...].astype(jnp.float32)
    b = b_ref[...].astype(jnp.float32)
    o_ref[...] = (xc * inv * w + b).astype(o_ref.dtype)


def _layernorm_cf_kernel(x_ref, w_ref, b_ref, o_ref, *, eps):
    """channels_first (no transpose): x tile is (1, C, THW); reduce along C
    (the sublane axis).  H*W stays on the lane axis."""
    x = x_ref[...].astype(jnp.float32)                         # (1, C, THW)
    mean = jnp.mean(x, axis=1, keepdims=True)                  # (1, 1, THW)
    xc = x - mean
    var = jnp.mean(xc * xc, axis=1, keepdims=True)
    inv = jax.lax.rsqrt(var + eps)
    w = w_ref[...].astype(jnp.float32)                         # (1, C, 1)
    b = b_ref[...].astype(jnp.float32)
    o_ref[...] = (xc * inv * w + b).astype(o_ref.dtype)


# ---------------------------------------------------------------------------
# Wrappers
# ---------------------------------------------------------------------------
def _layer_norm_channels_last(x, weight, bias, eps):
    c = x.shape[-1]
    orig_shape = x.shape
    x2 = x.reshape(-1, c)
    m = x2.shape[0]
    itemsize = jnp.dtype(x.dtype).itemsize
    limit = _vmem_limit_bytes()

    k = _LANES // c if (c < _LANES and _LANES % c == 0) else 0
    if k and m % k == 0:
        # Lane-pack with a FREE reshape (no padding pass): (M, C) -> (M/k, 128).
        mp = m // k
        tm = _pick_row_tile(mp, _LANES, itemsize, limit)
        xp = x2.reshape(mp, _LANES)
        wp = jnp.tile(weight, k).reshape(1, _LANES)
        bp = jnp.tile(bias, k).reshape(1, _LANES)
        # Block-diagonal 1/c segment matrix, built once at trace time.
        seg_np = np.kron(np.eye(k, dtype=np.float32),
                         np.full((c, c), 1.0 / c, dtype=np.float32))
        seg = jnp.asarray(seg_np)
        cost = pl.CostEstimate(
            flops=int(4 * mp * _LANES * _LANES + 8 * m * c),
            transcendentals=int(m),
            bytes_accessed=int(2 * m * c * itemsize))
        yp = pl.pallas_call(
            functools.partial(_layernorm_packed_kernel, eps=eps),
            out_shape=jax.ShapeDtypeStruct((mp, _LANES), x.dtype),
            grid_spec=pltpu.PrefetchScalarGridSpec(
                num_scalar_prefetch=0,
                grid=(pl.cdiv(mp, tm),),
                in_specs=[
                    pl.BlockSpec((tm, _LANES), lambda i: (i, 0)),
                    pl.BlockSpec((_LANES, _LANES), lambda i: (0, 0)),
                    pl.BlockSpec((1, _LANES), lambda i: (0, 0)),
                    pl.BlockSpec((1, _LANES), lambda i: (0, 0)),
                ],
                out_specs=pl.BlockSpec((tm, _LANES), lambda i: (i, 0)),
            ),
            compiler_params=pltpu.CompilerParams(
                dimension_semantics=("parallel",),
                vmem_limit_bytes=limit),
            cost_estimate=cost,
        )(xp, seg, wp, bp)
        return yp.reshape(orig_shape)

    # General path: C stays on the lane axis (C >= 128, 128 % C != 0, or the
    # lane-pack reshape would need padding).  Ragged last row block is masked.
    tm = _pick_row_tile(m, c, itemsize, limit)
    w2 = weight.reshape(1, c)
    b2 = bias.reshape(1, c)
    cost = pl.CostEstimate(flops=int(10 * m * c), transcendentals=int(m),
                           bytes_accessed=int(2 * m * c * itemsize))
    y2 = pl.pallas_call(
        functools.partial(_layernorm_rows_kernel, eps=eps),
        out_shape=jax.ShapeDtypeStruct((m, c), x.dtype),
        grid_spec=pltpu.PrefetchScalarGridSpec(
            num_scalar_prefetch=0,
            grid=(pl.cdiv(m, tm),),
            in_specs=[
                pl.BlockSpec((tm, c), lambda i: (i, 0)),
                pl.BlockSpec((1, c), lambda i: (0, 0)),
                pl.BlockSpec((1, c), lambda i: (0, 0)),
            ],
            out_specs=pl.BlockSpec((tm, c), lambda i: (i, 0)),
        ),
        compiler_params=pltpu.CompilerParams(
            dimension_semantics=("parallel",),
            vmem_limit_bytes=limit),
        cost_estimate=cost,
    )(x2, w2, b2)
    return y2.reshape(orig_shape)


def _layer_norm_channels_first(x, weight, bias, eps):
    n, c, h, w = x.shape
    hw = h * w
    itemsize = jnp.dtype(x.dtype).itemsize
    limit = _vmem_limit_bytes()

    # Lane tile along H*W (no transpose, no exact-divisor requirement): pick a
    # 128-multiple THW near the byte budget, cap it so the (n, cdiv(hw, THW))
    # grid has enough steps for megacore + pipelining, and let Pallas mask the
    # ragged last block (per-lane-column compute is independent).
    if hw >= _LANES:
        target_bytes = max(512 * 1024, limit // 12)
        thw = (target_bytes // max(1, c * itemsize)) // _LANES * _LANES
        thw = max(_LANES, thw)
        min_steps_hw = max(1, -(-8 // n))                    # ceil(8 / n)
        cap = max(_LANES, (hw // min_steps_hw) // _LANES * _LANES)
        thw = min(thw, cap, _round_up(hw, _LANES))
    else:
        thw = hw                                             # full lane extent

    # Fit test with headroom for the in-kernel f32 intermediates (x upcast,
    # x-mean, xc^2, broadcast mean/inv) on top of double-buffered I/O tiles.
    if c * thw * itemsize * 8 > limit:
        # Last resort only (e.g. enormous C): route through the NHWC path.
        xt = jnp.transpose(x, (0, 2, 3, 1))
        yt = _layer_norm_channels_last(xt, weight, bias, eps)
        return jnp.transpose(yt, (0, 3, 1, 2))

    # Note: for very small C (< 8 sublanes) a sublane-packing scheme could
    # recover vreg occupancy on v7x; skipped here (HBM-bound on v5e/v6e).
    x3 = x.reshape(n, c, hw)
    w3 = weight.reshape(1, c, 1)
    b3 = bias.reshape(1, c, 1)
    cost = pl.CostEstimate(flops=int(10 * n * c * hw), transcendentals=int(n * hw),
                           bytes_accessed=int(2 * n * c * hw * itemsize))
    y3 = pl.pallas_call(
        functools.partial(_layernorm_cf_kernel, eps=eps),
        out_shape=jax.ShapeDtypeStruct((n, c, hw), x.dtype),
        grid_spec=pltpu.PrefetchScalarGridSpec(
            num_scalar_prefetch=0,
            grid=(n, pl.cdiv(hw, thw)),
            in_specs=[
                pl.BlockSpec((1, c, thw), lambda i, j: (i, 0, j)),
                pl.BlockSpec((1, c, 1), lambda i, j: (0, 0, 0)),
                pl.BlockSpec((1, c, 1), lambda i, j: (0, 0, 0)),
            ],
            out_specs=pl.BlockSpec((1, c, thw), lambda i, j: (i, 0, j)),
        ),
        compiler_params=pltpu.CompilerParams(
            dimension_semantics=("parallel", "parallel"),
            vmem_limit_bytes=limit),
        cost_estimate=cost,
    )(x3, w3, b3)
    return y3.reshape(n, c, h, w)


def layer_norm_c(x, weight, bias, eps=1e-6, data_format="channels_last"):
    """JAX/Pallas equivalent of LayerNorm_C.forward."""
    if data_format == "channels_last":
        assert weight.shape == (x.shape[-1],)
        return _layer_norm_channels_last(x, weight, bias, eps)
    elif data_format == "channels_first":
        assert x.ndim == 4 and weight.shape == (x.shape[1],)
        return _layer_norm_channels_first(x, weight, bias, eps)
    else:
        raise NotImplementedError(data_format)


# ---------------------------------------------------------------------------
# Reference + self-test
# ---------------------------------------------------------------------------
def _reference(x, weight, bias, eps, data_format):
    xf = x.astype(jnp.float32)
    if data_format == "channels_last":
        axis = -1
        wb_shape = (1,) * (x.ndim - 1) + (x.shape[-1],)
    else:
        axis = 1
        wb_shape = (1, x.shape[1], 1, 1)
    u = jnp.mean(xf, axis=axis, keepdims=True)
    s = jnp.mean((xf - u) ** 2, axis=axis, keepdims=True)
    y = (xf - u) / jnp.sqrt(s + eps)
    return (weight.reshape(wb_shape) * y + bias.reshape(wb_shape)).astype(x.dtype)


if __name__ == "__main__":
    key = jax.random.PRNGKey(0)
    k1, k2 = jax.random.split(key)

    # --- channels_last: normalized_shape = hidden = 32, x: (N, H, W, C) ---
    C_last = 32
    x_last = jax.random.normal(k1, (2, 16, 16, C_last), dtype=jnp.float32)
    w_last = jnp.ones((C_last,), jnp.float32) + 0.01 * jnp.arange(C_last, dtype=jnp.float32)
    b_last = 0.001 * jnp.arange(C_last, dtype=jnp.float32)

    out_last = layer_norm_c(x_last, w_last, b_last, eps=1e-6,
                            data_format="channels_last")
    jax.block_until_ready(out_last)
    ref_last = _reference(x_last, w_last, b_last, 1e-6, "channels_last")
    assert jnp.allclose(out_last, ref_last, atol=1e-4, rtol=1e-4)

    # --- channels_first: normalized_shape = channels = 4, x: (N, C, H, W) ---
    C_first = 4
    x_first = jax.random.normal(k2, (2, C_first, 16, 16), dtype=jnp.float32)
    w_first = jnp.ones((C_first,), jnp.float32) + 0.1 * jnp.arange(C_first, dtype=jnp.float32)
    b_first = 0.01 * jnp.arange(C_first, dtype=jnp.float32)

    out_first = layer_norm_c(x_first, w_first, b_first, eps=1e-6,
                             data_format="channels_first")
    jax.block_until_ready(out_first)
    ref_first = _reference(x_first, w_first, b_first, 1e-6, "channels_first")
    assert jnp.allclose(out_first, ref_first, atol=1e-4, rtol=1e-4)

    print("KERNEL_OK")
</pallas_src>

<mosaic_0001>
module attributes {stable_mosaic.version = 11 : i64} {
  func.func @_layernorm_packed_kernel(%arg0: i32, %arg1: memref<16x128xf32, #tpu.memory_space<vmem>>, %arg2: memref<128x128xf32, #tpu.memory_space<vmem>>, %arg3: memref<1x128xf32, #tpu.memory_space<vmem>>, %arg4: memref<1x128xf32, #tpu.memory_space<vmem>>, %arg5: memref<16x128xf32, #tpu.memory_space<vmem>>) attributes {dimension_semantics = [#tpu.dimension_semantics<parallel>], iteration_bounds = array<i64: 8>, scalar_prefetch = 0 : i64, scratch_operands = 0 : i64, tpu.core_type = #tpu.core_type<tc>, window_params = [{transform_indices = @transform_0, window_bounds = array<i64: 16, 128>}, {pipeline_mode = #tpu.pipeline_mode<synchronous>, transform_indices = @transform_1, window_bounds = array<i64: 128, 128>}, {pipeline_mode = #tpu.pipeline_mode<synchronous>, transform_indices = @transform_2, window_bounds = array<i64: 1, 128>}, {pipeline_mode = #tpu.pipeline_mode<synchronous>, transform_indices = @transform_3, window_bounds = array<i64: 1, 128>}, {transform_indices = @transform_4, window_bounds = array<i64: 16, 128>}]} {
    %c0 = arith.constant 0 : index
    %c0_0 = arith.constant 0 : index
    %0 = vector.load %arg1[%c0, %c0_0] : memref<16x128xf32, #tpu.memory_space<vmem>>, vector<16x128xf32>
    %c0_1 = arith.constant 0 : index
    %c0_2 = arith.constant 0 : index
    %1 = vector.load %arg2[%c0_1, %c0_2] : memref<128x128xf32, #tpu.memory_space<vmem>>, vector<128x128xf32>
    %cst = arith.constant dense<0.000000e+00> : vector<16x128xf32>
    %2 = tpu.matmul %0, %1, %cst {dimension_numbers = #tpu.dot_dimension_numbers<[1], [0], [0], [1], [0, 0, 1, 1], [], []>} : vector<16x128xf32>, vector<128x128xf32>, vector<16x128xf32> -> vector<16x128xf32>
    %3 = arith.subf %0, %2 : vector<16x128xf32>
    %4 = arith.mulf %3, %3 : vector<16x128xf32>
    %cst_3 = arith.constant dense<0.000000e+00> : vector<16x128xf32>
    %5 = tpu.matmul %4, %1, %cst_3 {dimension_numbers = #tpu.dot_dimension_numbers<[1], [0], [0], [1], [0, 0, 1, 1], [], []>} : vector<16x128xf32>, vector<128x128xf32>, vector<16x128xf32> -> vector<16x128xf32>
    %cst_4 = arith.constant 9.99999997E-7 : f32
    %6 = vector.broadcast %cst_4 : f32 to vector<16x128xf32>
    %7 = arith.addf %5, %6 : vector<16x128xf32>
    %8 = math.rsqrt %7 : vector<16x128xf32>
    %c0_5 = arith.constant 0 : index
    %c0_6 = arith.constant 0 : index
    %9 = vector.load %arg3[%c0_5, %c0_6] : memref<1x128xf32, #tpu.memory_space<vmem>>, vector<1x128xf32>
    %c0_7 = arith.constant 0 : index
    %c0_8 = arith.constant 0 : index
    %10 = vector.load %arg4[%c0_7, %c0_8] : memref<1x128xf32, #tpu.memory_space<vmem>>, vector<1x128xf32>
    %11 = arith.mulf %3, %8 : vector<16x128xf32>
    %12 = vector.broadcast %9 : vector<1x128xf32> to vector<16x128xf32>
    %13 = arith.mulf %11, %12 : vector<16x128xf32>
    %14 = vector.broadcast %10 : vector<1x128xf32> to vector<16x128xf32>
    %15 = arith.addf %13, %14 : vector<16x128xf32>
    %c0_9 = arith.constant 0 : index
    %c0_10 = arith.constant 0 : index
    %16 = vector.load %arg5[%c0_9, %c0_10] : memref<16x128xf32, #tpu.memory_space<vmem>>, vector<16x128xf32>
    tpu.vector_store %arg5[%c0_9, %c0_10], %15 {strides = array<i32>} : memref<16x128xf32, #tpu.memory_space<vmem>>, vector<16x128xf32>,
    return
  }
  func.func @transform_0(%arg0: i32) -> (i32, i32) {
    %c0_i32 = arith.constant 0 : i32
    %c0_i32_0 = arith.constant 0 : i32
    return %arg0, %c0_i32 : i32, i32
  }
  func.func @transform_1(%arg0: i32) -> (i32, i32) {
    %c0_i32 = arith.constant 0 : i32
    %c0_i32_0 = arith.constant 0 : i32
    %c0_i32_1 = arith.constant 0 : i32
    return %c0_i32, %c0_i32_0 : i32, i32
  }
  func.func @transform_2(%arg0: i32) -> (i32, i32) {
    %c0_i32 = arith.constant 0 : i32
    %c0_i32_0 = arith.constant 0 : i32
    %c0_i32_1 = arith.constant 0 : i32
    return %c0_i32, %c0_i32_0 : i32, i32
  }
  func.func @transform_3(%arg0: i32) -> (i32, i32) {
    %c0_i32 = arith.constant 0 : i32
    %c0_i32_0 = arith.constant 0 : i32
    %c0_i32_1 = arith.constant 0 : i32
    return %c0_i32, %c0_i32_0 : i32, i32
  }
  func.func @transform_4(%arg0: i32) -> (i32, i32) {
    %c0_i32 = arith.constant 0 : i32
    %c0_i32_0 = arith.constant 0 : i32
    return %arg0, %c0_i32 : i32, i32
  }
}

</mosaic_0001>

<llo_original>
// kernel: tpu_custom_call.1
$region0: #{tpu_custom_call.1}
  #allocation0 [shape = 'u32[]', space=smem, size = 0x4, offset = 0x4, fixed_abs, tag = 'smem constant byte address 0x4 - core index']
  #allocation1 [shape = 'u32[144,128]{1,0:T(1,128)}', space=vmem, size = 0x12000, scoped, tag = 'internal scratch']
  %s0 = inlined_call_operand.hbm [shape: f32[128,128], index: 0, kind: input, shape index: {}]
  %s1 = inlined_call_operand.hbm [shape: f32[128,128], index: 1, kind: input, shape index: {}]
  %s2 = inlined_call_operand.vmem [shape: f32[1,128], index: 2, kind: input, shape index: {}]
  %s3 = inlined_call_operand.vmem [shape: f32[1,128], index: 3, kind: input, shape index: {}]
  %s4 = inlined_call_operand.hbm [shape: f32[128,128], index: 4, kind: output, shape index: {}]
  %s5 = sld [smem:[#allocation0]]
  $region57: #{tpu_custom_call.1} parent=0
    _
  %s7 = ssub.s32 1, %s5
  %s8 = scalar_select 0, %s7, %s5
  $region1: #{tpu_custom_call.1} parent=0
    #allocation2 [shape = 'u8[16384]{0}', space=vmem, size = 0x4000, scoped, tag = 'input window, operand 0']
    #allocation3 [shape = 's32[2]{0}', space=sflag, size = 0x8, scoped, tag = 'scoped memory for tpu_custom_call.1']
    #allocation4 [shape = 's32[2]{0}', space=sflag, size = 0x8, scoped, tag = 'scoped memory for tpu_custom_call.1']
    #allocation5 [shape = 'u8[65536]{0}', space=vmem, size = 0x10000, scoped, tag = 'input window, operand 1, single buffered']
    #allocation6 [shape = 's32[1]{0}', space=sflag, size = 0x4, scoped, tag = 'scoped memory for tpu_custom_call.1']
    #allocation7 [shape = 'u8[16384]{0}', space=vmem, size = 0x4000, scoped, tag = 'output window, operand 0']
    %9 = vsyncpa [#allocation3], 0
    %s10 = scalar_lea.sflag [#allocation3], 1
    %11 = vsyncpa %s10, 0
    %12 = vsyncpa [#allocation6], 0
    %13 = vsyncpa [#allocation4], 0
    %s14 = scalar_lea.sflag [#allocation4], 1
    %15 = vsyncpa %s14, 0
    loop: start=0, step=1, limit=10
    $region2: #{tpu_custom_call.1} parent=1 // loop_pre_header
      _
    $region3: #{tpu_custom_call.1} parent=1 // loop_header
      %s17 = sphi 0, %s21
      %p18 = scmp.ge.s32.totalorder %s17, 10
      %s27 = sphi 0, %s29
      %s30 = sphi 0, %s27
      %s31 = sphi 0, %s30
      %s47 = sphi 0, %s31
      %s51 = sphi 0, %s51
      %s53 = sphi 0, %s51
      %s54 = sphi 0, %s53
      %s68 = sphi 0, %s54
      %s72 = sphi 0, %s72
      %s74 = sphi 0, %s72
      %s75 = sphi 0, %s74
      %s89 = sphi 0, %s75
      %s93 = sphi 0, %s93
      %s95 = sphi 0, %s93
      %s96 = sphi 0, %s95
      %s110 = sphi 0, %s96
      %s116 = sphi 0, %s118
      %s119 = sphi 0, %s116
      %s120 = sphi 0, %s119
      %s136 = sphi 0, %s120
    $region4: #{tpu_custom_call.1} parent=1 // loop_header_branch
      %20 = sbr.rel (%p18) target = $region8
    $region5: #{tpu_custom_call.1} parent=1 // loop_body
      %s22 = ssub.s32 %s17, 1
      %s23 = ssub.s32 %s17, 2
      %s24 = sadd.s32 %s17, 1
      %s25 = ssub.s32 %s17, %s24
      %p26 = scmp.eq.s32.totalorder %s25, 0
      %s28 = sadd.s32 %s27, 1
      %s29 = scalar_select %p26, %s27, %s28
      %p32 = pneg %p26
      %p33 = scmp.eq.s32.totalorder %s17, 7
      %p34 = por %p32, %p33
      %p35 = scmp.ne.s32.totalorder %s27, %s30
      %p36 = scmp.eq.s32.totalorder %s17, 0
      %p37 = por %p35, %p36
      %p38 = scmp.ne.s32.totalorder %s27, %s30
      %p39 = scmp.eq.s32.totalorder %s22, 7
      %p40 = por %p38, %p39
      %p41 = scmp.ne.s32.totalorder %s30, %s31
      %p42 = scmp.eq.s32.totalorder %s22, 0
      %p43 = por %p41, %p42
      %p44 = scmp.ne.s32.totalorder %s30, %s31
      %p45 = scmp.eq.s32.totalorder %s23, 7
      %p46 = por %p44, %p45
      %p48 = scmp.ne.s32.totalorder %s31, %s47
      %p49 = scmp.eq.s32.totalorder %s23, 0
      %p50 = por %p48, %p49
      %s52 = sadd.s32 %s51, 1
      %p55 = scmp.eq.s32.totalorder %s17, 7
      %p56 = scmp.ne.s32.totalorder %s51, %s53
      %p57 = scmp.eq.s32.totalorder %s17, 0
      %p58 = por %p56, %p57
      %p59 = scmp.ne.s32.totalorder %s51, %s53
      %p60 = scmp.eq.s32.totalorder %s22, 7
      %p61 = por %p59, %p60
      %p62 = scmp.ne.s32.totalorder %s53, %s54
      %p63 = scmp.eq.s32.totalorder %s22, 0
      %p64 = por %p62, %p63
      %p65 = scmp.ne.s32.totalorder %s53, %s54
      %p66 = scmp.eq.s32.totalorder %s23, 7
      %p67 = por %p65, %p66
      %p69 = scmp.ne.s32.totalorder %s54, %s68
      %p70 = scmp.eq.s32.totalorder %s23, 0
      %p71 = por %p69, %p70
      %s73 = sadd.s32 %s72, 1
      %p76 = scmp.eq.s32.totalorder %s17, 7
      %p77 = scmp.ne.s32.totalorder %s72, %s74
      %p78 = scmp.eq.s32.totalorder %s17, 0
      %p79 = por %p77, %p78
      %p80 = scmp.ne.s32.totalorder %s72, %s74
      %p81 = scmp.eq.s32.totalorder %s22, 7
      %p82 = por %p80, %p81
      %p83 = scmp.ne.s32.totalorder %s74, %s75
      %p84 = scmp.eq.s32.totalorder %s22, 0
      %p85 = por %p83, %p84
      %p86 = scmp.ne.s32.totalorder %s74, %s75
      %p87 = scmp.eq.s32.totalorder %s23, 7
      %p88 = por %p86, %p87
      %p90 = scmp.ne.s32.totalorder %s75, %s89
      %p91 = scmp.eq.s32.totalorder %s23, 0
      %p92 = por %p90, %p91
      %s94 = sadd.s32 %s93, 1
      %p97 = scmp.eq.s32.totalorder %s17, 7
      %p98 = scmp.ne.s32.totalorder %s93, %s95
      %p99 = scmp.eq.s32.totalorder %s17, 0
      %p100 = por %p98, %p99
      %p101 = scmp.ne.s32.totalorder %s93, %s95
      %p102 = scmp.eq.s32.totalorder %s22, 7
      %p103 = por %p101, %p102
      %p104 = scmp.ne.s32.totalorder %s95, %s96
      %p105 = scmp.eq.s32.totalorder %s22, 0
      %p106 = por %p104, %p105
      %p107 = scmp.ne.s32.totalorder %s95, %s96
      %p108 = scmp.eq.s32.totalorder %s23, 7
      %p109 = por %p107, %p108
      %p111 = scmp.ne.s32.totalorder %s96, %s110
      %p112 = scmp.eq.s32.totalorder %s23, 0
      %p113 = por %p111, %p112
      %s114 = ssub.s32 %s17, %s24
      %p115 = scmp.eq.s32.totalorder %s114, 0
      %s117 = sadd.s32 %s116, 1
      %s118 = scalar_select %p115, %s116, %s117
      %p121 = pneg %p115
      %p122 = scmp.eq.s32.totalorder %s17, 7
      %p123 = por %p121, %p122
      %p124 = scmp.ne.s32.totalorder %s116, %s119
      %p125 = scmp.eq.s32.totalorder %s17, 0
      %p126 = por %p124, %p125
      %p127 = scmp.ne.s32.totalorder %s116, %s119
      %p128 = scmp.eq.s32.totalorder %s22, 7
      %p129 = por %p127, %p128
      %p130 = scmp.ne.s32.totalorder %s119, %s120
      %p131 = scmp.eq.s32.totalorder %s22, 0
      %p132 = por %p130, %p131
      %p133 = scmp.ne.s32.totalorder %s119, %s120
      %p134 = scmp.eq.s32.totalorder %s23, 7
      %p135 = por %p133, %p134
      %p137 = scmp.ne.s32.totalorder %s120, %s136
      %p138 = scmp.eq.s32.totalorder %s23, 0
      %p139 = por %p137, %p138
      %p140 = scmp.le.s32.totalorder 1, %s17
      %p141 = scmp.lt.s32.totalorder %s17, 9
      %p142 = pnand %p140, %p141
      %p143 = pneg %p142
      // Predicated region
      $region9: #{tpu_custom_call.1} parent=5 // pred_check
        _
      $region10: #{tpu_custom_call.1} parent=5 // pred_check_branch
        %145 = sbr.rel (%p142) target = $region12
      $region11: #{tpu_custom_call.1} parent=5 // pred_region
        %s146 = ssub.s32 %s17, 1
        // Predicated region
        $region13: #{tpu_custom_call.1} parent=11 // pred_check
          %p147 = pneg %p64
        $region14: #{tpu_custom_call.1} parent=11 // pred_check_branch
          %149 = sbr.rel (%p147) target = $region16
        $region15: #{tpu_custom_call.1} parent=11 // pred_region
          %s151 = ssub.s32 2048, 2048
          %152 = vsyncadd [#allocation6], %s151
          %s153 = sshll.u32 [#allocation5], 4
          %s154 = int_to_ptr.vmem [resolvable:$true] %s153
          %159 = dma.hbm_to_vmem [thread:$0]  %s1, 2048, %s154, [#allocation6], 128, 128, 8
        $region16: #{tpu_custom_call.1} parent=11 // pred_fallthru
          _
        // Predicated region
        $region17: #{tpu_custom_call.1} parent=11 // pred_check
          %p160 = pneg %p85
        $region18: #{tpu_custom_call.1} parent=11 // pred_check_branch
          %162 = sbr.rel (%p160) target = $region20
        $region19: #{tpu_custom_call.1} parent=11 // pred_region
          _
        $region20: #{tpu_custom_call.1} parent=11 // pred_fallthru
          _
        // Predicated region
        $region21: #{tpu_custom_call.1} parent=11 // pred_check
          %p163 = pneg %p106
        $region22: #{tpu_custom_call.1} parent=11 // pred_check_branch
          %165 = sbr.rel (%p163) target = $region24
        $region23: #{tpu_custom_call.1} parent=11 // pred_region
          _
        $region24: #{tpu_custom_call.1} parent=11 // pred_fallthru
          _
      $region12: #{tpu_custom_call.1} parent=5 // pred_fallthru
        _
      %p166 = scmp.lt.s32.totalorder %s17, 8
      // Predicated region
      $region25: #{tpu_custom_call.1} parent=5 // pred_check
        %p167 = pneg %p166
      $region26: #{tpu_custom_call.1} parent=5 // pred_check_branch
        %169 = sbr.rel (%p167) target = $region28
      $region27: #{tpu_custom_call.1} parent=5 // pred_region
        // Predicated region
        $region29: #{tpu_custom_call.1} parent=27 // pred_check
          %p170 = pneg %p37
        $region30: #{tpu_custom_call.1} parent=27 // pred_check_branch
          %172 = sbr.rel (%p170) target = $region32
        $region31: #{tpu_custom_call.1} parent=27 // pred_region
          %s173 = sand.u32 %s27, 1
          %s174 = scalar_lea.sflag [#allocation3], %s173
          %s175 = sand.u32 %s27, 1
          %s176 = smul.addr %s175, 16
          %s177 = scalar_lea.vmem [#allocation2], %s176
          %s178 = smul.u32 2, %s17
          %s180 = ssub.s32 256, 256
          %181 = vsyncadd %s174, %s180
          %s182 = smul.addr %s178, 128
          %s183 = scalar_lea.hbm %s0, %s182
          %s184 = sshll.u32 %s177, 4
          %s185 = int_to_ptr.vmem [resolvable:$true] %s184
          %190 = dma.hbm_to_vmem [thread:$0]  %s183, 256, %s185, %s174, 128, 128, 8
        $region32: #{tpu_custom_call.1} parent=27 // pred_fallthru
          _
      $region28: #{tpu_custom_call.1} parent=5 // pred_fallthru
        _
      %p191 = scmp.le.s32.totalorder 1, %s17
      %p192 = scmp.lt.s32.totalorder %s17, 9
      %p193 = pnand %p191, %p192
      %p194 = pneg %p193
      // Predicated region
      $region33: #{tpu_custom_call.1} parent=5 // pred_check
        _
      $region34: #{tpu_custom_call.1} parent=5 // pred_check_branch
        %196 = sbr.rel (%p193) target = $region36
      $region35: #{tpu_custom_call.1} parent=5 // pred_region
        %s197 = ssub.s32 %s17, 1
        %s198 = sand.u32 %s30, 1
        %s199 = scalar_lea.sflag [#allocation3], %s198
        %s200 = sand.u32 %s30, 1
        %s201 = smul.addr %s200, 16
        %s202 = scalar_lea.vmem [#allocation2], %s201
        // Predicated region
        $region37: #{tpu_custom_call.1} parent=35 // pred_check
          %p203 = pneg %p43
        $region38: #{tpu_custom_call.1} parent=35 // pred_check_branch
          %205 = sbr.rel (%p203) target = $region40
        $region39: #{tpu_custom_call.1} parent=35 // pred_region
          %206 = dma.done %s199, 256
        $region40: #{tpu_custom_call.1} parent=35 // pred_fallthru
          _
        // Predicated region
        $region41: #{tpu_custom_call.1} parent=35 // pred_check
          %p207 = pneg %p64
        $region42: #{tpu_custom_call.1} parent=35 // pred_check_branch
          %209 = sbr.rel (%p207) target = $region44
        $region43: #{tpu_custom_call.1} parent=35 // pred_region
          %210 = dma.done [#allocation6], 2048
        $region44: #{tpu_custom_call.1} parent=35 // pred_fallthru
          _
        %s211 = sand.u32 %s30, 1
        %s212 = scalar_lea.sflag [#allocation3], %s211
        %s213 = sand.u32 %s30, 1
        %s214 = smul.addr %s213, 16
        %s215 = scalar_lea.vmem [#allocation2], %s214
        %p216 = pneg %p43
        %p217 = pneg %p40
        %p218 = pneg %p64
        %p219 = pneg %p61
        %p220 = pneg %p85
        %p221 = pneg %p82
        %p222 = pneg %p106
        %p223 = pneg %p103
        %p224 = pneg %p132
        %p225 = pneg %p129
        %s226 = sand.u32 %s119, 1
        %s227 = scalar_lea.sflag [#allocation4], %s226
        %s228 = sand.u32 %s119, 1
        %s229 = smul.addr %s228, 16
        %s230 = scalar_lea.vmem [#allocation7], %s229
        %s231 = smul.u32 2, %s22
        %s232 = smul.u32 2, %s22
        %v233 = vld [vmem:[%s202] sm:$0xff]
        %v234 = vld [vmem:[%s202 + $0x8] sm:$0xff]
        %v235 = vld [vmem:[#allocation5] sm:$0xff]
        %v236 = vld [vmem:[#allocation5 + $0x8] sm:$0xff]
        %v237 = vld [vmem:[#allocation5 + $0x10] sm:$0xff]
        %v238 = vld [vmem:[#allocation5 + $0x18] sm:$0xff]
        %v239 = vld [vmem:[#allocation5 + $0x20] sm:$0xff]
        %v240 = vld [vmem:[#allocation5 + $0x28] sm:$0xff]
        %v241 = vld [vmem:[#allocation5 + $0x30] sm:$0xff]
        %v242 = vld [vmem:[#allocation5 + $0x38] sm:$0xff]
        %v243 = vld [vmem:[#allocation5 + $0x40] sm:$0xff]
        %v244 = vld [vmem:[#allocation5 + $0x48] sm:$0xff]
        %v245 = vld [vmem:[#allocation5 + $0x50] sm:$0xff]
        %v246 = vld [vmem:[#allocation5 + $0x58] sm:$0xff]
        %v247 = vld [vmem:[#allocation5 + $0x60] sm:$0xff]
        %v248 = vld [vmem:[#allocation5 + $0x68] sm:$0xff]
        %v249 = vld [vmem:[#allocation5 + $0x70] sm:$0xff]
        %v250 = vld [vmem:[#allocation5 + $0x78] sm:$0xff]
        %251 = vmatprep.subr.mxu0 0.0
        %252 = vmatpush1.msra.mxu0 %v250
        %253 = vmatprep.subr.mxu0 0.0
        %254 = vmatpush1.msra.mxu0 %v249
        %255 = vmatprep.subr.mxu0 0.0
        %256 = vmatpush1.msra.mxu0 %v248
        %257 = vmatprep.subr.mxu0 0.0
        %258 = vmatpush1.msra.mxu0 %v247
        %259 = vmatprep.subr.mxu0 0.0
        %260 = vmatpush1.msra.mxu0 %v246
        %261 = vmatprep.subr.mxu0 0.0
        %262 = vmatpush1.msra.mxu0 %v245
        %263 = vmatprep.subr.mxu0 0.0
        %264 = vmatpush1.msra.mxu0 %v244
        %265 = vmatprep.subr.mxu0 0.0
        %266 = vmatpush1.msra.mxu0 %v243
        %267 = vmatprep.subr.mxu0 0.0
        %268 = vmatpush1.msra.mxu0 %v242
        %269 = vmatprep.subr.mxu0 0.0
        %270 = vmatpush1.msra.mxu0 %v241
        %271 = vmatprep.subr.mxu0 0.0
        %272 = vmatpush1.msra.mxu0 %v240
        %273 = vmatprep.subr.mxu0 0.0
        %274 = vmatpush1.msra.mxu0 %v239
        %275 = vmatprep.subr.mxu0 0.0
        %276 = vmatpush1.msra.mxu0 %v238
        %277 = vmatprep.subr.mxu0 0.0
        %278 = vmatpush1.msra.mxu0 %v237
        %279 = vmatprep.subr.mxu0 0.0
        %280 = vmatpush1.msra.mxu0 %v236
        %281 = vmatprep.subr.mxu0 0.0
        %282 = vmatpush1.msra.mxu0 %v235
        %283 = vmatprep.subr.mxu0 0.0
        %284 = vmatpush2.msra.mxu0 0.0
        %285 = vmatprep.subr.mxu0 0.0
        %286 = vmatpush2.msra.mxu0 0.0
        %287 = vmatprep.subr.mxu0 0.0
        %288 = vmatpush2.msra.mxu0 0.0
        %289 = vmatprep.subr.mxu0 0.0
        %290 = vmatpush2.msra.mxu0 0.0
        %291 = vmatprep.subr.mxu0 0.0
        %292 = vmatpush2.msra.mxu0 0.0
        %293 = vmatprep.subr.mxu0 0.0
        %294 = vmatpush2.msra.mxu0 0.0
        %295 = vmatprep.subr.mxu0 0.0
        %296 = vmatpush2.msra.mxu0 0.0
        %297 = vmatprep.subr.mxu0 0.0
        %298 = vmatpush2.msra.mxu0 0.0
        %299 = vmatprep.subr.mxu0 0.0
        %300 = vmatpush2.msra.mxu0 0.0
        %301 = vmatprep.subr.mxu0 0.0
        %302 = vmatpush2.msra.mxu0 0.0
        %303 = vmatprep.subr.mxu0 0.0
        %304 = vmatpush2.msra.mxu0 0.0
        %305 = vmatprep.subr.mxu0 0.0
        %306 = vmatpush2.msra.mxu0 0.0
        %307 = vmatprep.subr.mxu0 0.0
        %308 = vmatpush2.msra.mxu0 0.0
        %309 = vmatprep.subr.mxu0 0.0
        %310 = vmatpush2.msra.mxu0 0.0
        %311 = vmatprep.subr.mxu0 0.0
        %312 = vmatpush2.msra.mxu0 0.0
        %313 = vmatprep.subr.mxu0 0.0
        %314 = vmatpush2.msra.mxu0 0.0
        %315 = vmatprep.mubr.f32.mxu0 0.0
        %316 = vmatmul.mubr.f32.gmra.mxu0 %v233
        %v317 = vpop.f32.mrf.mxu0
        %v318 = vadd.f32 0.0, %v317
        %v319 = vpop.f32.mrf.mxu0
        %320 = vmatprep.mubr.f32.mxu0 0.0
        %321 = vmatmul.mubr.f32.gmra.mxu0 %v234
        %v322 = vpop.f32.mrf.mxu0
        %v323 = vadd.f32 0.0, %v322
        %v324 = vpop.f32.mrf.mxu0
        %325 = vdwg.mxu0
        %v326 = vsub.f32 %v233, %v318
        %v327 = vsub.f32 %v234, %v323
        %v328 = vmul.f32 %v326, %v326
        %v329 = vmul.f32 %v327, %v327
        %330 = vmatprep.subr.mxu0 0.0
        %331 = vmatpush1.msra.mxu0 %v250
        %332 = vmatprep.subr.mxu0 0.0
        %333 = vmatpush1.msra.mxu0 %v249
        %334 = vmatprep.subr.mxu0 0.0
        %335 = vmatpush1.msra.mxu0 %v248
        %336 = vmatprep.subr.mxu0 0.0
        %337 = vmatpush1.msra.mxu0 %v247
        %338 = vmatprep.subr.mxu0 0.0
        %339 = vmatpush1.msra.mxu0 %v246
        %340 = vmatprep.subr.mxu0 0.0
        %341 = vmatpush1.msra.mxu0 %v245
        %342 = vmatprep.subr.mxu0 0.0
        %343 = vmatpush1.msra.mxu0 %v244
        %344 = vmatprep.subr.mxu0 0.0
        %345 = vmatpush1.msra.mxu0 %v243
        %346 = vmatprep.subr.mxu0 0.0
        %347 = vmatpush1.msra.mxu0 %v242
        %348 = vmatprep.subr.mxu0 0.0
        %349 = vmatpush1.msra.mxu0 %v241
        %350 = vmatprep.subr.mxu0 0.0
        %351 = vmatpush1.msra.mxu0 %v240
        %352 = vmatprep.subr.mxu0 0.0
        %353 = vmatpush1.msra.mxu0 %v239
        %354 = vmatprep.subr.mxu0 0.0
        %355 = vmatpush1.msra.mxu0 %v238
        %356 = vmatprep.subr.mxu0 0.0
        %357 = vmatpush1.msra.mxu0 %v237
        %358 = vmatprep.subr.mxu0 0.0
        %359 = vmatpush1.msra.mxu0 %v236
        %360 = vmatprep.subr.mxu0 0.0
        %361 = vmatpush1.msra.mxu0 %v235
        %362 = vmatprep.subr.mxu0 0.0
        %363 = vmatpush2.msra.mxu0 0.0
        %364 = vmatprep.subr.mxu0 0.0
        %365 = vmatpush2.msra.mxu0 0.0
        %366 = vmatprep.subr.mxu0 0.0
        %367 = vmatpush2.msra.mxu0 0.0
        %368 = vmatprep.subr.mxu0 0.0
        %369 = vmatpush2.msra.mxu0 0.0
        %370 = vmatprep.subr.mxu0 0.0
        %371 = vmatpush2.msra.mxu0 0.0
        %372 = vmatprep.subr.mxu0 0.0
        %373 = vmatpush2.msra.mxu0 0.0
        %374 = vmatprep.subr.mxu0 0.0
        %375 = vmatpush2.msra.mxu0 0.0
        %376 = vmatprep.subr.mxu0 0.0
        %377 = vmatpush2.msra.mxu0 0.0
        %378 = vmatprep.subr.mxu0 0.0
        %379 = vmatpush2.msra.mxu0 0.0
        %380 = vmatprep.subr.mxu0 0.0
        %381 = vmatpush2.msra.mxu0 0.0
        %382 = vmatprep.subr.mxu0 0.0
        %383 = vmatpush2.msra.mxu0 0.0
        %384 = vmatprep.subr.mxu0 0.0
        %385 = vmatpush2.msra.mxu0 0.0
        %386 = vmatprep.subr.mxu0 0.0
        %387 = vmatpush2.msra.mxu0 0.0
        %388 = vmatprep.subr.mxu0 0.0
        %389 = vmatpush2.msra.mxu0 0.0
        %390 = vmatprep.subr.mxu0 0.0
        %391 = vmatpush2.msra.mxu0 0.0
        %392 = vmatprep.subr.mxu0 0.0
        %393 = vmatpush2.msra.mxu0 0.0
        %394 = vmatprep.mubr.f32.mxu0 0.0
        %395 = vmatmul.mubr.f32.gmra.mxu0 %v328
        %v396 = vpop.f32.mrf.mxu0
        %v397 = vadd.f32 1e-06, %v396
        %v398 = vpop.f32.mrf.mxu0
        %399 = vmatprep.mubr.f32.mxu0 0.0
        %400 = vmatmul.mubr.f32.gmra.mxu0 %v329
        %v401 = vpop.f32.mrf.mxu0
        %v402 = vadd.f32 1e-06, %v401
        %v403 = vpop.f32.mrf.mxu0
        %404 = vdwg.mxu0
        %v405 = vrsqrt.pop %v397
        %v406 = vrsqrt.pop %v402
        %v407 = vld [vmem:[%s2] sm:$0x1]
        %v408 = vld [vmem:[%s3] sm:$0x1]
        %v409 = vmul.f32 %v326, %v405
        %v410 = vmul.f32 %v327, %v406
        %v412 = vlaneseq
        %v413 = vshrl.u32 %v412, 7
        %v414 = vsub.s32 0, %v413
        %v415 = vrot.slane %v407, %v414
        %v417 = vmul.f32 %v409, %v415
        %v418 = vmul.f32 %v410, %v415
        %v420 = vlaneseq
        %v421 = vshrl.u32 %v420, 7
        %v422 = vsub.s32 0, %v421
        %v423 = vrot.slane %v408, %v422
        %v425 = vadd.f32 %v417, %v423
        %v426 = vadd.f32 %v418, %v423
        %427 = vst [vmem:[%s230] sm:$0xff] %v425
        %428 = vst [vmem:[%s230 + $0x8] sm:$0xff] %v426
        %s429 = sand.u32 %s119, 1
        %s430 = scalar_lea.sflag [#allocation4], %s429
        %s431 = sand.u32 %s119, 1
        %s432 = smul.addr %s431, 16
        %s433 = scalar_lea.vmem [#allocation7], %s432
        // Predicated region
        $region45: #{tpu_custom_call.1} parent=35 // pred_check
          %p434 = pneg %p129
        $region46: #{tpu_custom_call.1} parent=35 // pred_check_branch
          %436 = sbr.rel (%p434) target = $region48
        $region47: #{tpu_custom_call.1} parent=35 // pred_region
          %s437 = smul.u32 2, %s22
          %s439 = ssub.s32 256, 256
          %440 = vsyncadd %s430, %s439
          %s441 = smul.addr %s437, 128
          %s442 = scalar_lea.hbm %s4, %s441
          %s443 = sshll.u32 %s433, 4
          %s444 = int_to_ptr.vmem [resolvable:$true] %s443
          %449 = dma.vmem_to_hbm [thread:$0]  %s444, 256, %s442, %s430, 128, 128, 8
        $region48: #{tpu_custom_call.1} parent=35 // pred_fallthru
          _
      $region36: #{tpu_custom_call.1} parent=5 // pred_fallthru
        _
      %p450 = scmp.le.s32.totalorder 2, %s17
      // Predicated region
      $region49: #{tpu_custom_call.1} parent=5 // pred_check
        %p451 = pneg %p450
      $region50: #{tpu_custom_call.1} parent=5 // pred_check_branch
        %453 = sbr.rel (%p451) target = $region52
      $region51: #{tpu_custom_call.1} parent=5 // pred_region
        %s454 = ssub.s32 %s17, 2
        // Predicated region
        $region53: #{tpu_custom_call.1} parent=51 // pred_check
          %p455 = pneg %p135
        $region54: #{tpu_custom_call.1} parent=51 // pred_check_branch
          %457 = sbr.rel (%p455) target = $region56
        $region55: #{tpu_custom_call.1} parent=51 // pred_region
          %s458 = sand.u32 %s120, 1
          %s459 = scalar_lea.sflag [#allocation4], %s458
          %s460 = sand.u32 %s120, 1
          %s461 = smul.addr %s460, 16
          %s462 = scalar_lea.vmem [#allocation7], %s461
          %463 = dma.done %s459, 256
        $region56: #{tpu_custom_call.1} parent=51 // pred_fallthru
          _
      $region52: #{tpu_custom_call.1} parent=5 // pred_fallthru
        _
    $region6: #{tpu_custom_call.1} parent=1 // loop_footer
      %s21 = sadd.s32 1, %s17
    $region7: #{tpu_custom_call.1} parent=1 // loop_footer_branch
      %16 = sbr.rel target = $region3
    $region8: #{tpu_custom_call.1} parent=1 // loop_exit
      _
    %464 = vsyncpa [#allocation3], 1
    %s465 = scalar_lea.sflag [#allocation3], 1
    %466 = vsyncpa %s465, 1
    %467 = vsyncpa [#allocation6], 1
    %468 = vsyncpa [#allocation4], 1
    %s469 = scalar_lea.sflag [#allocation4], 1
    %470 = vsyncpa %s469, 1

</llo_original>
